<compile_context>
chip_gen: v7x
topology: tpu7x:2x2x1
jax: 0.10.0
libtpu: 0.0.40
codegen_flags: <defaults>
</compile_context>

<pallas_src>
import jax
import jax.numpy as jnp
from jax.experimental import pallas as pl
from jax.experimental.pallas import tpu as pltpu

_NEG_INF = -1e30  # finite "minus infinity" to avoid inf-inf NaN paths


def _make_kernel(t_tile, t_valid, has_pad, score_dtype):
    def kernel(x_ref, w1_ref, b1_ref, w2_ref, b2_ref, out_ref, m_sc, stat_sc):
        k = pl.program_id(1)
        nk = pl.num_programs(1)

        @pl.when(k == 0)
        def _():
            m_sc[...] = jnp.full_like(m_sc, _NEG_INF)
            stat_sc[...] = jnp.zeros_like(stat_sc)

        x_raw = x_ref[0]                                   # (C, Tt), input dtype
        x = x_raw.astype(jnp.float32)                      # stats path stays f32
        x_mm = x_raw.astype(score_dtype)                   # MXU operand (bf16 fast path)

        # attention scores for this time tile (MXU matmuls, f32 accumulation).
        h = jnp.tanh(
            jnp.dot(w1_ref[...], x_mm, preferred_element_type=jnp.float32)
            + b1_ref[...])                                 # (A, Tt) f32
        s = (jnp.dot(w2_ref[...], h.astype(score_dtype),
                     preferred_element_type=jnp.float32)
             + b2_ref[...])                                # (C, Tt) f32

        if has_pad:
            # lane-only (1, Tt) mask folded into one broadcast add; padded time
            # steps get ~-inf scores so their softmax weight is exactly 0.
            t_idx = jax.lax.broadcasted_iota(jnp.int32, (1, t_tile), 1) + k * t_tile
            s = s + jnp.where(t_idx < t_valid, 0.0, _NEG_INF)

        # online softmax update over time (per channel).
        m_new = jnp.maximum(m_sc[...], jnp.max(s, axis=1, keepdims=True))   # (C,1)
        scale = jnp.exp(m_sc[...] - m_new)                                  # (C,1)
        p = jnp.exp(s - m_new)                                              # (C,Tt)
        px = p * x
        deltas = jnp.concatenate(
            [jnp.sum(p, axis=1, keepdims=True),
             jnp.sum(px, axis=1, keepdims=True),
             jnp.sum(px * x, axis=1, keepdims=True)], axis=1)               # (C,3)
        stat_sc[...] = scale * stat_sc[...] + deltas        # fused update of l/am/as
        m_sc[...] = m_new

        @pl.when(k == nk - 1)
        def _():
            stats = stat_sc[...]                            # (C,3): [l, sum px, sum pxx]
            inv_l = pl.reciprocal(stats[:, 0:1], approx=False)
            mean = stats[:, 1:2] * inv_l                    # (C,1)
            ex2 = stats[:, 2:3] * inv_l
            std = jnp.sqrt(jnp.maximum(ex2 - mean * mean, 1e-9))
            out_ref[0] = jnp.concatenate([mean, std], axis=1).astype(out_ref.dtype)

    return kernel


def attentive_stats_pool(x, w1, b1, w2, b2, *, t_tile=None,
                         score_dtype=jnp.bfloat16):
    """x: (B, C, T); w1: (A, C); b1: (A,); w2: (C, A); b2: (C,). Returns (B, 2C).

    score_dtype controls the MXU operand precision for the attention scores
    (default bf16 = fast path; jnp.float32 = exact path). All softmax/stats
    accumulation is f32 regardless. bf16 x (HBM) is supported and is the
    bandwidth fast path.
    """
    B, C, T = x.shape
    A = w1.shape[0]
    x_itemsize = jnp.dtype(x.dtype).itemsize
    score_itemsize = jnp.dtype(score_dtype).itemsize

    # --- VMEM-capacity-driven time tile (per TPU generation) ---------------
    try:
        vmem_cap = int(pltpu.get_tpu_info().vmem_capacity_bytes)
    except Exception:
        vmem_cap = 64 * 1024 * 1024   # conservative default (fits v7x too)

    if t_tile is None:
        budget = (vmem_cap * 11) // 20               # ~55% for double-buffered x
        tt = budget // max(1, 2 * C * x_itemsize)
        tt = max(128, min(int(tt), 4096))
    else:
        tt = max(128, int(t_tile))
    tt = (tt // 128) * 128                            # lane-dense time tiles
    tt = min(tt, pl.cdiv(T, 128) * 128)
    nk = pl.cdiv(T, tt)
    t_pad = nk * tt
    has_pad = (t_pad != T)
    if has_pad:
        x = jnp.pad(x, ((0, 0), (0, 0), (0, t_pad - T)))

    # weights in the matmul dtype (cast once here), biases stay f32.
    w1_c = w1.astype(score_dtype)
    w2_c = w2.astype(score_dtype)
    b1_2d = b1.reshape(A, 1).astype(jnp.float32)
    b2_2d = b2.reshape(C, 1).astype(jnp.float32)

    # per-generation VMEM limit: enough for the chosen tile + headroom.
    need = (2 * C * tt * x_itemsize                  # double-buffered x tile
            + 2 * (2 * A * C) * score_itemsize       # W1/W2
            + 2 * (A + C) * 4                        # biases
            + 2 * (C * 128) * 4                      # m / packed-stat scratch (lane-padded)
            + (2 << 20))                             # output + misc headroom
    vmem_limit = int(min(vmem_cap * 0.9, max(need + (8 << 20), 48 << 20)))
    vmem_limit = max(vmem_limit, need)

    cost = pl.CostEstimate(
        flops=4 * B * t_pad * A * C + 10 * B * t_pad * C,
        transcendentals=B * t_pad * (A + C),
        bytes_accessed=B * C * t_pad * x_itemsize
        + 2 * A * C * score_itemsize + (A + C) * 4
        + 2 * B * C * x_itemsize,
    )

    kernel = _make_kernel(tt, T, has_pad, score_dtype)

    out3 = pl.pallas_call(
        kernel,
        out_shape=jax.ShapeDtypeStruct((B, C, 2), x.dtype),
        grid_spec=pltpu.PrefetchScalarGridSpec(
            num_scalar_prefetch=0,
            grid=(B, nk),
            in_specs=[
                pl.BlockSpec((1, C, tt), lambda b, k: (b, 0, k)),   # x time tile
                pl.BlockSpec((A, C), lambda b, k: (0, 0)),          # W1 (resident)
                pl.BlockSpec((A, 1), lambda b, k: (0, 0)),          # b1
                pl.BlockSpec((C, A), lambda b, k: (0, 0)),          # W2 (resident)
                pl.BlockSpec((C, 1), lambda b, k: (0, 0)),          # b2
            ],
            out_specs=pl.BlockSpec((1, C, 2), lambda b, k: (b, 0, 0)),  # [mean|std]
            scratch_shapes=[
                pltpu.VMEM((C, 1), jnp.float32),   # running max m
                pltpu.VMEM((C, 3), jnp.float32),   # packed [l, sum(p*x), sum(p*x^2)]
            ],
        ),
        compiler_params=pltpu.CompilerParams(
            dimension_semantics=("parallel", "arbitrary"),
            vmem_limit_bytes=vmem_limit,
        ),
        cost_estimate=cost,
    )(x, w1_c, b1_2d, w2_c, b2_2d)

    # (B, C, 2) -> (B, 2, C) -> (B, 2C) == torch.cat([mean, std], dim=1)
    return out3.transpose(0, 2, 1).reshape(B, 2 * C)


def attentive_stats_pool_ref(x, w1, b1, w2, b2):
    """Pure-JAX reference mirroring the PyTorch forward (global_context_att=False)."""
    h = jnp.tanh(jnp.einsum('ac,bct->bat', w1, x) + b1[None, :, None])
    s = jnp.einsum('ca,bat->bct', w2, h) + b2[None, :, None]
    alpha = jax.nn.softmax(s, axis=2)
    mean = jnp.sum(alpha * x, axis=2)
    var = jnp.sum(alpha * x * x, axis=2) - mean ** 2
    std = jnp.sqrt(jnp.maximum(var, 1e-9))
    return jnp.concatenate([mean, std], axis=1)


if __name__ == "__main__":
    # AttentiveStatsPool(in_dim=16, attention_channels=8) on x of shape
    # (batch=2, channels=16, time=200); t_tile=128 so the online-softmax
    # accumulation and the padded-tail masking are both exercised (2 T-tiles).
    B, C, T, A = 2, 16, 200, 8

    key = jax.random.PRNGKey(0)
    kx, kw1, kb1, kw2, kb2 = jax.random.split(key, 5)

    x = jax.random.normal(kx, (B, C, T), dtype=jnp.float32)
    # nn.Conv1d(C, A, 1): weight (A, C), bias (A,)
    w1 = jax.random.normal(kw1, (A, C), dtype=jnp.float32) * 0.1
    b1 = jax.random.normal(kb1, (A,), dtype=jnp.float32) * 0.1
    # nn.Conv1d(A, C, 1): weight (C, A), bias (C,)
    w2 = jax.random.normal(kw2, (C, A), dtype=jnp.float32) * 0.1
    b2 = jax.random.normal(kb2, (C,), dtype=jnp.float32) * 0.1

    ref = attentive_stats_pool_ref(x, w1, b1, w2, b2)

    # exact path (f32 MXU operands): multi-tile online softmax + padded tail.
    out_exact = attentive_stats_pool(x, w1, b1, w2, b2, t_tile=128,
                                     score_dtype=jnp.float32)
    out_exact = jax.block_until_ready(out_exact)
    assert out_exact.shape == (B, 2 * C)
    assert jnp.allclose(out_exact, ref, atol=1e-4, rtol=1e-4), "f32 mismatch vs reference"

    # default fast path (bf16 MXU operands, f32 softmax/stats accumulation).
    out_fast = attentive_stats_pool(x, w1, b1, w2, b2, t_tile=128)
    out_fast = jax.block_until_ready(out_fast)
    assert out_fast.shape == (B, 2 * C)
    assert jnp.allclose(out_fast, ref, atol=2e-2, rtol=2e-2), "bf16 mismatch vs reference"

    # no-padding path (static has_pad=False branch) + auto tile selection.
    x2 = x[:, :, :128]
    out2 = jax.block_until_ready(
        attentive_stats_pool(x2, w1, b1, w2, b2, score_dtype=jnp.float32))
    ref2 = attentive_stats_pool_ref(x2, w1, b1, w2, b2)
    assert jnp.allclose(out2, ref2, atol=1e-4, rtol=1e-4), "no-pad mismatch vs reference"

    print("KERNEL_OK")
</pallas_src>

<mosaic_0001>
module attributes {stable_mosaic.version = 11 : i64} {
  func.func @kernel(%arg0: i32, %arg1: i32, %arg2: memref<1x16x128xf32, #tpu.memory_space<vmem>>, %arg3: memref<8x16xf32, #tpu.memory_space<vmem>>, %arg4: memref<8x1xf32, #tpu.memory_space<vmem>>, %arg5: memref<16x8xf32, #tpu.memory_space<vmem>>, %arg6: memref<16x1xf32, #tpu.memory_space<vmem>>, %arg7: memref<1x16x2xf32, #tpu.memory_space<vmem>>, %arg8: memref<16x1xf32, #tpu.memory_space<vmem>>, %arg9: memref<16x3xf32, #tpu.memory_space<vmem>>) attributes {dimension_semantics = [#tpu.dimension_semantics<parallel>, #tpu.dimension_semantics<arbitrary>], iteration_bounds = array<i64: 2, 2>, scalar_prefetch = 0 : i64, scratch_operands = 2 : i64, tpu.core_type = #tpu.core_type<tc>, window_params = [{transform_indices = @transform_0, window_bounds = array<i64: 1, 16, 128>}, {pipeline_mode = #tpu.pipeline_mode<synchronous>, transform_indices = @transform_1, window_bounds = array<i64: 8, 16>}, {pipeline_mode = #tpu.pipeline_mode<synchronous>, transform_indices = @transform_2, window_bounds = array<i64: 8, 1>}, {pipeline_mode = #tpu.pipeline_mode<synchronous>, transform_indices = @transform_3, window_bounds = array<i64: 16, 8>}, {pipeline_mode = #tpu.pipeline_mode<synchronous>, transform_indices = @transform_4, window_bounds = array<i64: 16, 1>}, {transform_indices = @transform_5, window_bounds = array<i64: 1, 16, 2>}]} {
    %c0_i32 = arith.constant 0 : i32
    %0 = arith.cmpi eq, %arg1, %c0_i32 : i32
    %1 = arith.extui %0 : i1 to i32
    %c0_i32_0 = arith.constant 0 : i32
    %2 = arith.cmpi ne, %1, %c0_i32_0 : i32
    scf.if %2 {
      %cst_29 = arith.constant -1.000000e+30 : f32
      %55 = vector.broadcast %cst_29 : f32 to vector<16x1xf32>
      %c0_30 = arith.constant 0 : index
      %c0_31 = arith.constant 0 : index
      %56 = vector.load %arg8[%c0_30, %c0_31] : memref<16x1xf32, #tpu.memory_space<vmem>>, vector<16x1xf32>
      tpu.vector_store %arg8[%c0_30, %c0_31], %55 {strides = array<i32>} : memref<16x1xf32, #tpu.memory_space<vmem>>, vector<16x1xf32>,
      %cst_32 = arith.constant 0.000000e+00 : f32
      %57 = vector.broadcast %cst_32 : f32 to vector<16x3xf32>
      %c0_33 = arith.constant 0 : index
      %c0_34 = arith.constant 0 : index
      %58 = vector.load %arg9[%c0_33, %c0_34] : memref<16x3xf32, #tpu.memory_space<vmem>>, vector<16x3xf32>
      tpu.vector_store %arg9[%c0_33, %c0_34], %57 {strides = array<i32>} : memref<16x3xf32, #tpu.memory_space<vmem>>, vector<16x3xf32>,
    } else {
    }
    %c0 = arith.constant 0 : index
    %c0_1 = arith.constant 0 : index
    %c0_2 = arith.constant 0 : index
    %3 = vector.load %arg2[%c0, %c0_1, %c0_2] : memref<1x16x128xf32, #tpu.memory_space<vmem>>, vector<1x16x128xf32>
    %4 = vector.shape_cast %3 : vector<1x16x128xf32> to vector<16x128xf32>
    %c0_3 = arith.constant 0 : index
    %c0_4 = arith.constant 0 : index
    %5 = vector.load %arg3[%c0_3, %c0_4] : memref<8x16xf32, #tpu.memory_space<vmem>>, vector<8x16xf32>
    %cst = arith.constant dense<0.000000e+00> : vector<8x128xf32>
    %6 = tpu.matmul %5, %4, %cst {dimension_numbers = #tpu.dot_dimension_numbers<[1], [0], [0], [1], [0, 0, 1, 1], [], []>} : vector<8x16xf32>, vector<16x128xf32>, vector<8x128xf32> -> vector<8x128xf32>
    %c0_5 = arith.constant 0 : index
    %c0_6 = arith.constant 0 : index
    %7 = vector.load %arg4[%c0_5, %c0_6] : memref<8x1xf32, #tpu.memory_space<vmem>>, vector<8x1xf32>
    %8 = vector.broadcast %7 : vector<8x1xf32> to vector<8x128xf32>
    %9 = arith.addf %6, %8 : vector<8x128xf32>
    %10 = math.tanh %9 : vector<8x128xf32>
    %c0_7 = arith.constant 0 : index
    %c0_8 = arith.constant 0 : index
    %11 = vector.load %arg5[%c0_7, %c0_8] : memref<16x8xf32, #tpu.memory_space<vmem>>, vector<16x8xf32>
    %cst_9 = arith.constant dense<0.000000e+00> : vector<16x128xf32>
    %12 = tpu.matmul %11, %10, %cst_9 {dimension_numbers = #tpu.dot_dimension_numbers<[1], [0], [0], [1], [0, 0, 1, 1], [], []>} : vector<16x8xf32>, vector<8x128xf32>, vector<16x128xf32> -> vector<16x128xf32>
    %c0_10 = arith.constant 0 : index
    %c0_11 = arith.constant 0 : index
    %13 = vector.load %arg6[%c0_10, %c0_11] : memref<16x1xf32, #tpu.memory_space<vmem>>, vector<16x1xf32>
    %14 = vector.broadcast %13 : vector<16x1xf32> to vector<16x128xf32>
    %15 = arith.addf %12, %14 : vector<16x128xf32>
    %16 = tpu.iota {dimensions = array<i32: 1>} : vector<1x128xi32>
    %c128_i32 = arith.constant 128 : i32
    %17 = arith.muli %arg1, %c128_i32 : i32
    %18 = vector.broadcast %17 : i32 to vector<1x128xi32>
    %19 = arith.addi %16, %18 : vector<1x128xi32>
    %c200_i32 = arith.constant 200 : i32
    %20 = vector.broadcast %c200_i32 : i32 to vector<1x128xi32>
    %21 = arith.cmpi slt, %19, %20 : vector<1x128xi32>
    %cst_12 = arith.constant 0.000000e+00 : f32
    %cst_13 = arith.constant -1.000000e+30 : f32
    %22 = vector.broadcast %cst_12 : f32 to vector<1x128xf32>
    %23 = vector.broadcast %cst_13 : f32 to vector<1x128xf32>
    %24 = arith.select %21, %22, %23 : vector<1x128xi1>, vector<1x128xf32>
    %25 = vector.broadcast %24 : vector<1x128xf32> to vector<16x128xf32>
    %26 = arith.addf %15, %25 : vector<16x128xf32>
    %c0_14 = arith.constant 0 : index
    %c0_15 = arith.constant 0 : index
    %27 = vector.load %arg8[%c0_14, %c0_15] : memref<16x1xf32, #tpu.memory_space<vmem>>, vector<16x1xf32>
    %cst_16 = arith.constant dense<0xFF800000> : vector<16xf32>
    %28 = vector.multi_reduction <maximumf>, %26, %cst_16 [1] : vector<16x128xf32> to vector<16xf32>
    %29 = vector.shape_cast %28 : vector<16xf32> to vector<16x1xf32>
    %30 = arith.maximumf %27, %29 : vector<16x1xf32>
    %c0_17 = arith.constant 0 : index
    %c0_18 = arith.constant 0 : index
    %31 = vector.load %arg8[%c0_17, %c0_18] : memref<16x1xf32, #tpu.memory_space<vmem>>, vector<16x1xf32>
    %32 = arith.subf %31, %30 : vector<16x1xf32>
    %33 = math.exp %32 : vector<16x1xf32>
    %34 = vector.broadcast %30 : vector<16x1xf32> to vector<16x128xf32>
    %35 = arith.subf %26, %34 : vector<16x128xf32>
    %36 = math.exp %35 : vector<16x128xf32>
    %37 = arith.mulf %36, %4 : vector<16x128xf32>
    %cst_19 = arith.constant dense<0.000000e+00> : vector<16xf32>
    %38 = vector.multi_reduction <add>, %36, %cst_19 [1] : vector<16x128xf32> to vector<16xf32>
    %39 = vector.shape_cast %38 : vector<16xf32> to vector<16x1xf32>
    %cst_20 = arith.constant dense<0.000000e+00> : vector<16xf32>
    %40 = vector.multi_reduction <add>, %37, %cst_20 [1] : vector<16x128xf32> to vector<16xf32>
    %41 = vector.shape_cast %40 : vector<16xf32> to vector<16x1xf32>
    %42 = arith.mulf %37, %4 : vector<16x128xf32>
    %cst_21 = arith.constant dense<0.000000e+00> : vector<16xf32>
    %43 = vector.multi_reduction <add>, %42, %cst_21 [1] : vector<16x128xf32> to vector<16xf32>
    %44 = vector.shape_cast %43 : vector<16xf32> to vector<16x1xf32>
    %45 = tpu.concatenate %39, %41, %44 in 1 : vector<16x1xf32>, vector<16x1xf32>, vector<16x1xf32> -> vector<16x3xf32>
    %c0_22 = arith.constant 0 : index
    %c0_23 = arith.constant 0 : index
    %46 = vector.load %arg9[%c0_22, %c0_23] : memref<16x3xf32, #tpu.memory_space<vmem>>, vector<16x3xf32>
    %47 = vector.broadcast %33 : vector<16x1xf32> to vector<16x3xf32>
    %48 = arith.mulf %47, %46 : vector<16x3xf32>
    %49 = arith.addf %48, %45 : vector<16x3xf32>
    %c0_24 = arith.constant 0 : index
    %c0_25 = arith.constant 0 : index
    %50 = vector.load %arg9[%c0_24, %c0_25] : memref<16x3xf32, #tpu.memory_space<vmem>>, vector<16x3xf32>
    tpu.vector_store %arg9[%c0_24, %c0_25], %49 {strides = array<i32>} : memref<16x3xf32, #tpu.memory_space<vmem>>, vector<16x3xf32>,
    %c0_26 = arith.constant 0 : index
    %c0_27 = arith.constant 0 : index
    %51 = vector.load %arg8[%c0_26, %c0_27] : memref<16x1xf32, #tpu.memory_space<vmem>>, vector<16x1xf32>
    tpu.vector_store %arg8[%c0_26, %c0_27], %30 {strides = array<i32>} : memref<16x1xf32, #tpu.memory_space<vmem>>, vector<16x1xf32>,
    %c1_i32 = arith.constant 1 : i32
    %52 = arith.cmpi eq, %arg1, %c1_i32 : i32
    %53 = arith.extui %52 : i1 to i32
    %c0_i32_28 = arith.constant 0 : i32
    %54 = arith.cmpi ne, %53, %c0_i32_28 : i32
    scf.if %54 {
      %c0_29 = arith.constant 0 : index
      %c0_30 = arith.constant 0 : index
      %55 = vector.load %arg9[%c0_29, %c0_30] : memref<16x3xf32, #tpu.memory_space<vmem>>, vector<16x3xf32>
      %56 = vector.extract_strided_slice %55 {offsets = [0, 0], sizes = [16, 1], strides = [1, 1]} : vector<16x3xf32> to vector<16x1xf32>
      %57 = tpu.reciprocal %56 : vector<16x1xf32> -> vector<16x1xf32>
      %58 = vector.extract_strided_slice %55 {offsets = [0, 1], sizes = [16, 1], strides = [1, 1]} : vector<16x3xf32> to vector<16x1xf32>
      %59 = arith.mulf %58, %57 : vector<16x1xf32>
      %60 = vector.extract_strided_slice %55 {offsets = [0, 2], sizes = [16, 1], strides = [1, 1]} : vector<16x3xf32> to vector<16x1xf32>
      %61 = arith.mulf %60, %57 : vector<16x1xf32>
      %62 = arith.mulf %59, %59 : vector<16x1xf32>
      %63 = arith.subf %61, %62 : vector<16x1xf32>
      %cst_31 = arith.constant 9.99999971E-10 : f32
      %64 = vector.broadcast %cst_31 : f32 to vector<16x1xf32>
      %65 = arith.maximumf %63, %64 : vector<16x1xf32>
      %66 = math.sqrt %65 : vector<16x1xf32>
      %67 = tpu.concatenate %59, %66 in 1 : vector<16x1xf32>, vector<16x1xf32> -> vector<16x2xf32>
      %c0_32 = arith.constant 0 : index
      %c0_33 = arith.constant 0 : index
      %c0_34 = arith.constant 0 : index
      %68 = vector.load %arg7[%c0_32, %c0_33, %c0_34] : memref<1x16x2xf32, #tpu.memory_space<vmem>>, vector<1x16x2xf32>
      %69 = vector.shape_cast %68 : vector<1x16x2xf32> to vector<16x2xf32>
      %70 = vector.shape_cast %67 : vector<16x2xf32> to vector<1x16x2xf32>
      tpu.vector_store %arg7[%c0_32, %c0_33, %c0_34], %70 {strides = array<i32>} : memref<1x16x2xf32, #tpu.memory_space<vmem>>, vector<1x16x2xf32>,
    } else {
    }
    return
  }
  func.func @transform_0(%arg0: i32, %arg1: i32) -> (i32, i32, i32) {
    %c0_i32 = arith.constant 0 : i32
    %c0_i32_0 = arith.constant 0 : i32
    return %arg0, %c0_i32, %arg1 : i32, i32, i32
  }
  func.func @transform_1(%arg0: i32, %arg1: i32) -> (i32, i32) {
    %c0_i32 = arith.constant 0 : i32
    %c0_i32_0 = arith.constant 0 : i32
    %c0_i32_1 = arith.constant 0 : i32
    return %c0_i32, %c0_i32_0 : i32, i32
  }
  func.func @transform_2(%arg0: i32, %arg1: i32) -> (i32, i32) {
    %c0_i32 = arith.constant 0 : i32
    %c0_i32_0 = arith.constant 0 : i32
    %c0_i32_1 = arith.constant 0 : i32
    return %c0_i32, %c0_i32_0 : i32, i32
  }
  func.func @transform_3(%arg0: i32, %arg1: i32) -> (i32, i32) {
    %c0_i32 = arith.constant 0 : i32
    %c0_i32_0 = arith.constant 0 : i32
    %c0_i32_1 = arith.constant 0 : i32
    return %c0_i32, %c0_i32_0 : i32, i32
  }
  func.func @transform_4(%arg0: i32, %arg1: i32) -> (i32, i32) {
    %c0_i32 = arith.constant 0 : i32
    %c0_i32_0 = arith.constant 0 : i32
    %c0_i32_1 = arith.constant 0 : i32
    return %c0_i32, %c0_i32_0 : i32, i32
  }
  func.func @transform_5(%arg0: i32, %arg1: i32) -> (i32, i32, i32) {
    %c0_i32 = arith.constant 0 : i32
    %c0_i32_0 = arith.constant 0 : i32
    %c0_i32_1 = arith.constant 0 : i32
    return %arg0, %c0_i32, %c0_i32_0 : i32, i32, i32
  }
}

</mosaic_0001>

<llo_original>
// kernel: tpu_custom_call.1
$region0: #{tpu_custom_call.1}
  #allocation0 [shape = 'u32[]', space=smem, size = 0x4, offset = 0x4, fixed_abs, tag = 'smem constant byte address 0x4 - core index']
  #allocation1 [shape = 'u32[144,128]{1,0:T(1,128)}', space=vmem, size = 0x12000, scoped, tag = 'internal scratch']
  #allocation2 [shape = 'f32[16,1]{1,0:T(8,128)}', space=vmem, size = 0x2000, scoped, tag = 'scratch operand']
  #allocation3 [shape = 'f32[16,3]{1,0:T(8,128)}', space=vmem, size = 0x2000, scoped, tag = 'scratch operand']
  %s0 = inlined_call_operand.hbm [shape: f32[2,16,256], index: 0, kind: input, shape index: {}]
  %s1 = inlined_call_operand.vmem [shape: f32[8,16], index: 1, kind: input, shape index: {}]
  %s2 = inlined_call_operand.vmem [shape: f32[8,1], index: 2, kind: input, shape index: {}]
  %s3 = inlined_call_operand.vmem [shape: f32[16,8], index: 3, kind: input, shape index: {}]
  %s4 = inlined_call_operand.vmem [shape: f32[16,1], index: 4, kind: input, shape index: {}]
  %s5 = inlined_call_operand.vmem [shape: f32[2,16,2], index: 5, kind: output, shape index: {}]
  %s6 = sld [smem:[#allocation0]]
  $region65: #{tpu_custom_call.1} parent=0
    _
  %s8 = ssub.s32 1, %s6
  %s9 = scalar_select 0, %s8, %s6
  $region1: #{tpu_custom_call.1} parent=0
    #allocation4 [shape = 'u8[16384]{0}', space=vmem, size = 0x4000, scoped, tag = 'input window, operand 0']
    #allocation5 [shape = 's32[2]{0}', space=sflag, size = 0x8, scoped, tag = 'scoped memory for tpu_custom_call.1']
    %10 = vsyncpa [#allocation5], 0
    %s11 = scalar_lea.sflag [#allocation5], 1
    %12 = vsyncpa %s11, 0
    loop: start=0, step=1, limit=6
    $region2: #{tpu_custom_call.1} parent=1 // loop_pre_header
      _
    $region3: #{tpu_custom_call.1} parent=1 // loop_header
      %s14 = sphi 0, %s18
      %p15 = scmp.ge.s32.totalorder %s14, 6
      %s21 = sphi 0, %s33
      %s22 = sphi 0, %s29
      %s23 = sphi 0, %s21
      %s24 = sphi 0, %s22
      %s25 = sphi 0, %s23
      %s26 = sphi 0, %s24
      %s38 = sphi 0, %s40
      %s41 = sphi 0, %s38
      %s42 = sphi 0, %s41
      %s58 = sphi 0, %s42
      %s62 = sphi 0, %s62
      %s64 = sphi 0, %s62
      %s65 = sphi 0, %s64
      %s79 = sphi 0, %s65
      %s83 = sphi 0, %s83
      %s85 = sphi 0, %s83
      %s86 = sphi 0, %s85
      %s100 = sphi 0, %s86
      %s104 = sphi 0, %s104
      %s106 = sphi 0, %s104
      %s107 = sphi 0, %s106
      %s121 = sphi 0, %s107
      %s125 = sphi 0, %s125
      %s127 = sphi 0, %s125
      %s128 = sphi 0, %s127
      %s142 = sphi 0, %s128
      %s148 = sphi 0, %s150
      %s151 = sphi 0, %s148
      %s152 = sphi 0, %s151
      %s168 = sphi 0, %s152
    $region4: #{tpu_custom_call.1} parent=1 // loop_header_branch
      %17 = sbr.rel (%p15) target = $region8
    $region5: #{tpu_custom_call.1} parent=1 // loop_body
      %s19 = ssub.s32 %s14, 1
      %s20 = ssub.s32 %s14, 2
      %s27 = sadd.s32 1, %s22
      %p28 = scmp.ge.s32.totalorder %s27, 2
      %s29 = scalar_select %p28, 0, %s27
      %s30 = sadd.s32 1, %s21
      %s31 = scalar_select %p28, %s30, %s21
      %p32 = scmp.ge.s32.totalorder %s31, 2
      %s33 = scalar_select %p32, 0, %s31
      %s34 = ssub.s32 %s21, %s33
      %s35 = ssub.s32 %s22, %s29
      %s36 = sor.u32 %s34, %s35
      %p37 = scmp.eq.s32.totalorder %s36, 0
      %s39 = sadd.s32 %s38, 1
      %s40 = scalar_select %p37, %s38, %s39
      %p43 = pneg %p37
      %p44 = scmp.eq.s32.totalorder %s14, 3
      %p45 = por %p43, %p44
      %p46 = scmp.ne.s32.totalorder %s38, %s41
      %p47 = scmp.eq.s32.totalorder %s14, 0
      %p48 = por %p46, %p47
      %p49 = scmp.ne.s32.totalorder %s38, %s41
      %p50 = scmp.eq.s32.totalorder %s19, 3
      %p51 = por %p49, %p50
      %p52 = scmp.ne.s32.totalorder %s41, %s42
      %p53 = scmp.eq.s32.totalorder %s19, 0
      %p54 = por %p52, %p53
      %p55 = scmp.ne.s32.totalorder %s41, %s42
      %p56 = scmp.eq.s32.totalorder %s20, 3
      %p57 = por %p55, %p56
      %p59 = scmp.ne.s32.totalorder %s42, %s58
      %p60 = scmp.eq.s32.totalorder %s20, 0
      %p61 = por %p59, %p60
      %s63 = sadd.s32 %s62, 1
      %p66 = scmp.eq.s32.totalorder %s14, 3
      %p67 = scmp.ne.s32.totalorder %s62, %s64
      %p68 = scmp.eq.s32.totalorder %s14, 0
      %p69 = por %p67, %p68
      %p70 = scmp.ne.s32.totalorder %s62, %s64
      %p71 = scmp.eq.s32.totalorder %s19, 3
      %p72 = por %p70, %p71
      %p73 = scmp.ne.s32.totalorder %s64, %s65
      %p74 = scmp.eq.s32.totalorder %s19, 0
      %p75 = por %p73, %p74
      %p76 = scmp.ne.s32.totalorder %s64, %s65
      %p77 = scmp.eq.s32.totalorder %s20, 3
      %p78 = por %p76, %p77
      %p80 = scmp.ne.s32.totalorder %s65, %s79
      %p81 = scmp.eq.s32.totalorder %s20, 0
      %p82 = por %p80, %p81
      %s84 = sadd.s32 %s83, 1
      %p87 = scmp.eq.s32.totalorder %s14, 3
      %p88 = scmp.ne.s32.totalorder %s83, %s85
      %p89 = scmp.eq.s32.totalorder %s14, 0
      %p90 = por %p88, %p89
      %p91 = scmp.ne.s32.totalorder %s83, %s85
      %p92 = scmp.eq.s32.totalorder %s19, 3
      %p93 = por %p91, %p92
      %p94 = scmp.ne.s32.totalorder %s85, %s86
      %p95 = scmp.eq.s32.totalorder %s19, 0
      %p96 = por %p94, %p95
      %p97 = scmp.ne.s32.totalorder %s85, %s86
      %p98 = scmp.eq.s32.totalorder %s20, 3
      %p99 = por %p97, %p98
      %p101 = scmp.ne.s32.totalorder %s86, %s100
      %p102 = scmp.eq.s32.totalorder %s20, 0
      %p103 = por %p101, %p102
      %s105 = sadd.s32 %s104, 1
      %p108 = scmp.eq.s32.totalorder %s14, 3
      %p109 = scmp.ne.s32.totalorder %s104, %s106
      %p110 = scmp.eq.s32.totalorder %s14, 0
      %p111 = por %p109, %p110
      %p112 = scmp.ne.s32.totalorder %s104, %s106
      %p113 = scmp.eq.s32.totalorder %s19, 3
      %p114 = por %p112, %p113
      %p115 = scmp.ne.s32.totalorder %s106, %s107
      %p116 = scmp.eq.s32.totalorder %s19, 0
      %p117 = por %p115, %p116
      %p118 = scmp.ne.s32.totalorder %s106, %s107
      %p119 = scmp.eq.s32.totalorder %s20, 3
      %p120 = por %p118, %p119
      %p122 = scmp.ne.s32.totalorder %s107, %s121
      %p123 = scmp.eq.s32.totalorder %s20, 0
      %p124 = por %p122, %p123
      %s126 = sadd.s32 %s125, 1
      %p129 = scmp.eq.s32.totalorder %s14, 3
      %p130 = scmp.ne.s32.totalorder %s125, %s127
      %p131 = scmp.eq.s32.totalorder %s14, 0
      %p132 = por %p130, %p131
      %p133 = scmp.ne.s32.totalorder %s125, %s127
      %p134 = scmp.eq.s32.totalorder %s19, 3
      %p135 = por %p133, %p134
      %p136 = scmp.ne.s32.totalorder %s127, %s128
      %p137 = scmp.eq.s32.totalorder %s19, 0
      %p138 = por %p136, %p137
      %p139 = scmp.ne.s32.totalorder %s127, %s128
      %p140 = scmp.eq.s32.totalorder %s20, 3
      %p141 = por %p139, %p140
      %p143 = scmp.ne.s32.totalorder %s128, %s142
      %p144 = scmp.eq.s32.totalorder %s20, 0
      %p145 = por %p143, %p144
      %s146 = ssub.s32 %s21, %s33
      %p147 = scmp.eq.s32.totalorder %s146, 0
      %s149 = sadd.s32 %s148, 1
      %s150 = scalar_select %p147, %s148, %s149
      %p153 = pneg %p147
      %p154 = scmp.eq.s32.totalorder %s14, 3
      %p155 = por %p153, %p154
      %p156 = scmp.ne.s32.totalorder %s148, %s151
      %p157 = scmp.eq.s32.totalorder %s14, 0
      %p158 = por %p156, %p157
      %p159 = scmp.ne.s32.totalorder %s148, %s151
      %p160 = scmp.eq.s32.totalorder %s19, 3
      %p161 = por %p159, %p160
      %p162 = scmp.ne.s32.totalorder %s151, %s152
      %p163 = scmp.eq.s32.totalorder %s19, 0
      %p164 = por %p162, %p163
      %p165 = scmp.ne.s32.totalorder %s151, %s152
      %p166 = scmp.eq.s32.totalorder %s20, 3
      %p167 = por %p165, %p166
      %p169 = scmp.ne.s32.totalorder %s152, %s168
      %p170 = scmp.eq.s32.totalorder %s20, 0
      %p171 = por %p169, %p170
      %p172 = scmp.le.s32.totalorder 1, %s14
      %p173 = scmp.lt.s32.totalorder %s14, 5
      %p174 = pnand %p172, %p173
      %p175 = pneg %p174
      // Predicated region
      $region9: #{tpu_custom_call.1} parent=5 // pred_check
        _
      $region10: #{tpu_custom_call.1} parent=5 // pred_check_branch
        %177 = sbr.rel (%p174) target = $region12
      $region11: #{tpu_custom_call.1} parent=5 // pred_region
        %s178 = ssub.s32 %s14, 1
        // Predicated region
        $region13: #{tpu_custom_call.1} parent=11 // pred_check
          %p179 = pneg %p75
        $region14: #{tpu_custom_call.1} parent=11 // pred_check_branch
          %181 = sbr.rel (%p179) target = $region16
        $region15: #{tpu_custom_call.1} parent=11 // pred_region
          _
        $region16: #{tpu_custom_call.1} parent=11 // pred_fallthru
          _
        // Predicated region
        $region17: #{tpu_custom_call.1} parent=11 // pred_check
          %p182 = pneg %p96
        $region18: #{tpu_custom_call.1} parent=11 // pred_check_branch
          %184 = sbr.rel (%p182) target = $region20
        $region19: #{tpu_custom_call.1} parent=11 // pred_region
          _
        $region20: #{tpu_custom_call.1} parent=11 // pred_fallthru
          _
        // Predicated region
        $region21: #{tpu_custom_call.1} parent=11 // pred_check
          %p185 = pneg %p117
        $region22: #{tpu_custom_call.1} parent=11 // pred_check_branch
          %187 = sbr.rel (%p185) target = $region24
        $region23: #{tpu_custom_call.1} parent=11 // pred_region
          _
        $region24: #{tpu_custom_call.1} parent=11 // pred_fallthru
          _
        // Predicated region
        $region25: #{tpu_custom_call.1} parent=11 // pred_check
          %p188 = pneg %p138
        $region26: #{tpu_custom_call.1} parent=11 // pred_check_branch
          %190 = sbr.rel (%p188) target = $region28
        $region27: #{tpu_custom_call.1} parent=11 // pred_region
          _
        $region28: #{tpu_custom_call.1} parent=11 // pred_fallthru
          _
      $region12: #{tpu_custom_call.1} parent=5 // pred_fallthru
        _
      %p191 = scmp.lt.s32.totalorder %s14, 4
      // Predicated region
      $region29: #{tpu_custom_call.1} parent=5 // pred_check
        %p192 = pneg %p191
      $region30: #{tpu_custom_call.1} parent=5 // pred_check_branch
        %194 = sbr.rel (%p192) target = $region32
      $region31: #{tpu_custom_call.1} parent=5 // pred_region
        // Predicated region
        $region33: #{tpu_custom_call.1} parent=31 // pred_check
          %p195 = pneg %p48
        $region34: #{tpu_custom_call.1} parent=31 // pred_check_branch
          %197 = sbr.rel (%p195) target = $region36
        $region35: #{tpu_custom_call.1} parent=31 // pred_region
          %s198 = sand.u32 %s38, 1
          %s199 = scalar_lea.sflag [#allocation5], %s198
          %s200 = sand.u32 %s38, 1
          %s201 = smul.addr %s200, 16
          %s202 = scalar_lea.vmem [#allocation4], %s201
          %s204 = ssub.s32 256, 256
          %205 = vsyncadd %s199, %s204
          %s206 = smul.addr %s21, 4
          %s207 = sadd.s32 %s22, %s206
          %s208 = smul.addr %s207, 128
          %s209 = scalar_lea.hbm %s0, %s208
          %s210 = sshll.u32 %s202, 4
          %s211 = int_to_ptr.vmem [resolvable:$true] %s210
          %216 = dma.hbm_to_vmem [thread:$0]  %s209, 256, %s211, %s199, 256, 128, 8
        $region36: #{tpu_custom_call.1} parent=31 // pred_fallthru
          _
      $region32: #{tpu_custom_call.1} parent=5 // pred_fallthru
        _
      %p217 = scmp.le.s32.totalorder 1, %s14
      %p218 = scmp.lt.s32.totalorder %s14, 5
      %p219 = pnand %p217, %p218
      %p220 = pneg %p219
      // Predicated region
      $region37: #{tpu_custom_call.1} parent=5 // pred_check
        _
      $region38: #{tpu_custom_call.1} parent=5 // pred_check_branch
        %222 = sbr.rel (%p219) target = $region40
      $region39: #{tpu_custom_call.1} parent=5 // pred_region
        %s223 = ssub.s32 %s14, 1
        %s224 = sand.u32 %s41, 1
        %s225 = scalar_lea.sflag [#allocation5], %s224
        %s226 = sand.u32 %s41, 1
        %s227 = smul.addr %s226, 16
        %s228 = scalar_lea.vmem [#allocation4], %s227
        // Predicated region
        $region41: #{tpu_custom_call.1} parent=39 // pred_check
          %p229 = pneg %p54
        $region42: #{tpu_custom_call.1} parent=39 // pred_check_branch
          %231 = sbr.rel (%p229) target = $region44
        $region43: #{tpu_custom_call.1} parent=39 // pred_region
          %232 = dma.done %s225, 256
        $region44: #{tpu_custom_call.1} parent=39 // pred_fallthru
          _
        %s233 = sand.u32 %s41, 1
        %s234 = scalar_lea.sflag [#allocation5], %s233
        %s235 = sand.u32 %s41, 1
        %s236 = smul.addr %s235, 16
        %s237 = scalar_lea.vmem [#allocation4], %s236
        %p238 = pneg %p54
        %p239 = pneg %p51
        %p240 = pneg %p75
        %p241 = pneg %p72
        %p242 = pneg %p96
        %p243 = pneg %p93
        %p244 = pneg %p117
        %p245 = pneg %p114
        %p246 = pneg %p138
        %p247 = pneg %p135
        %p248 = pneg %p164
        %p249 = pneg %p161
        %p250 = scmp.lt.s32.totalorder %s23, 1
        %s251 = scalar_select %p250, %s23, 1
        %s252 = smul.addr %s251, 2
        %s253 = smul.addr %s252, 8
        %s254 = scalar_lea.vmem %s5, %s253
        %p255 = scmp.lt.s32.totalorder %s23, 1
        %s256 = scalar_select %p255, %s23, 1
        %s257 = smul.addr %s256, 2
        %s258 = smul.addr %s257, 8
        %s259 = scalar_lea.vmem %s5, %s258
        %p260 = scmp.eq.s32.totalorder %s24, 0
        // Predicated region
        $region45: #{tpu_custom_call.1} parent=39 // pred_check
          %p261 = pneg %p260
        $region46: #{tpu_custom_call.1} parent=39 // pred_check_branch
          %263 = sbr.rel (%p261) target = $region48
        $region47: #{tpu_custom_call.1} parent=39 // pred_region
          %vm264 = vcmask 7168
          %265 = vst.msk [vmem:[#allocation2] sm:$0xff] %vm264, -1e+30
          %266 = vst.msk [vmem:[#allocation2 + $0x8] sm:$0xff] %vm264, -1e+30
          %vm267 = vcmask 23552
          %268 = vst.msk [vmem:[#allocation3] sm:$0xff] %vm267, 0.0
          %269 = vst.msk [vmem:[#allocation3 + $0x8] sm:$0xff] %vm267, 0.0
        $region48: #{tpu_custom_call.1} parent=39 // pred_fallthru
          _
        %v270 = vld [vmem:[%s228] sm:$0xff]
        %v271 = vld [vmem:[%s228 + $0x8] sm:$0xff]
        %v272 = vld [vmem:[%s1] sm:$0xff]
        %v273 = vld [vmem:[%s2] sm:$0xff]
        %275 = vset.pattern.permute.xlu0 0
        %276 = vperm.xlu0 %275, %v273
        %v277 = vpop.permute.xlu0 %276
        %vm279 = vcmask 130048
        %v281 = vsel %vm279, %v272, 0
        %283 = vmatprep.subr.mxu0 0.0
        %284 = vmatpush1.msra.mxu0 %v270
        %285 = vmatprep.subr.mxu0 0.0
        %286 = vmatpush1.msra.mxu0 %v271
        %287 = vmatprep.subr.mxu0 0.0
        %288 = vmatpush1.msra.mxu0 0.0
        %289 = vmatprep.subr.mxu0 0.0
        %290 = vmatpush1.msra.mxu0 0.0
        %291 = vmatprep.subr.mxu0 0.0
        %292 = vmatpush1.msra.mxu0 0.0
        %293 = vmatprep.subr.mxu0 0.0
        %294 = vmatpush1.msra.mxu0 0.0
        %295 = vmatprep.subr.mxu0 0.0
        %296 = vmatpush1.msra.mxu0 0.0
        %297 = vmatprep.subr.mxu0 0.0
        %298 = vmatpush1.msra.mxu0 0.0
        %299 = vmatprep.subr.mxu0 0.0
        %300 = vmatpush1.msra.mxu0 0.0
        %301 = vmatprep.subr.mxu0 0.0
        %302 = vmatpush1.msra.mxu0 0.0
        %303 = vmatprep.subr.mxu0 0.0
        %304 = vmatpush1.msra.mxu0 0.0
        %305 = vmatprep.subr.mxu0 0.0
        %306 = vmatpush1.msra.mxu0 0.0
        %307 = vmatprep.subr.mxu0 0.0
        %308 = vmatpush1.msra.mxu0 0.0
        %309 = vmatprep.subr.mxu0 0.0
        %310 = vmatpush1.msra.mxu0 0.0
        %311 = vmatprep.subr.mxu0 0.0
        %312 = vmatpush1.msra.mxu0 0.0
        %313 = vmatprep.subr.mxu0 0.0
        %314 = vmatpush1.msra.mxu0 0.0
        %315 = vmatprep.subr.mxu0 0.0
        %316 = vmatpush1.msra.mxu0 0.0
        %317 = vmatprep.subr.mxu0 0.0
        %318 = vmatpush1.msra.mxu0 0.0
        %319 = vmatprep.subr.mxu0 0.0
        %320 = vmatpush1.msra.mxu0 0.0
        %321 = vmatprep.subr.mxu0 0.0
        %322 = vmatpush1.msra.mxu0 0.0
        %323 = vmatprep.subr.mxu0 0.0
        %324 = vmatpush1.msra.mxu0 0.0
        %325 = vmatprep.subr.mxu0 0.0
        %326 = vmatpush1.msra.mxu0 0.0
        %327 = vmatprep.subr.mxu0 0.0
        %328 = vmatpush1.msra.mxu0 0.0
        %329 = vmatprep.subr.mxu0 0.0
        %330 = vmatpush1.msra.mxu0 0.0
        %331 = vmatprep.subr.mxu0 0.0
        %332 = vmatpush1.msra.mxu0 0.0
        %333 = vmatprep.subr.mxu0 0.0
        %334 = vmatpush1.msra.mxu0 0.0
        %335 = vmatprep.subr.mxu0 0.0
        %336 = vmatpush1.msra.mxu0 0.0
        %337 = vmatprep.subr.mxu0 0.0
        %338 = vmatpush1.msra.mxu0 0.0
        %339 = vmatprep.subr.mxu0 0.0
        %340 = vmatpush1.msra.mxu0 0.0
        %341 = vmatprep.subr.mxu0 0.0
        %342 = vmatpush1.msra.mxu0 0.0
        %343 = vmatprep.subr.mxu0 0.0
        %344 = vmatpush1.msra.mxu0 0.0
        %345 = vmatprep.subr.mxu0 0.0
        %346 = vmatpush1.msra.mxu0 0.0
        %347 = vmatprep.mubr.f32.mxu0 0.0
        %348 = vmatmul.mubr.f32.gmra.mrb[0].mxu0 %v281
        %v349 = vpop.f32.mrb[0].mxu0
        %v350 = vadd.f32 %v277, %v349
        %v351 = vpop.f32.mrb[0].mxu0
        %352 = vdwg.mxu0
        %v353 = vtanh.pop %v350
        %v354 = vld [vmem:[%s3] sm:$0xff]
        %v355 = vld [vmem:[%s3 + $0x8] sm:$0xff]
        %v356 = vld [vmem:[%s4] sm:$0xff]
        %v357 = vld [vmem:[%s4 + $0x8] sm:$0xff]
        %359 = vset.pattern.permute.xlu0 0
        %360 = vperm.xlu0 %359, %v356
        %v361 = vpop.permute.xlu0 %360
        %364 = vset.pattern.permute.xlu0 0
        %365 = vperm.xlu0 %364, %v357
        %v366 = vpop.permute.xlu0 %365
        %vm368 = vcmask 64512
        %v370 = vsel %vm368, %v354, 0
        %v373 = vsel %vm368, %v355, 0
        %375 = vmatprep.subr.mxu0 0.0
        %376 = vmatpush1.msra.mxu0 %v353
        %377 = vmatprep.subr.mxu0 0.0
        %378 = vmatpush1.msra.mxu0 0.0
        %379 = vmatprep.subr.mxu0 0.0
        %380 = vmatpush1.msra.mxu0 0.0
        %381 = vmatprep.subr.mxu0 0.0
        %382 = vmatpush1.msra.mxu0 0.0
        %383 = vmatprep.subr.mxu0 0.0
        %384 = vmatpush1.msra.mxu0 0.0
        %385 = vmatprep.subr.mxu0 0.0
        %386 = vmatpush1.msra.mxu0 0.0
        %387 = vmatprep.subr.mxu0 0.0
        %388 = vmatpush1.msra.mxu0 0.0
        %389 = vmatprep.subr.mxu0 0.0
        %390 = vmatpush1.msra.mxu0 0.0
        %391 = vmatprep.subr.mxu0 0.0
        %392 = vmatpush1.msra.mxu0 0.0
        %393 = vmatprep.subr.mxu0 0.0
        %394 = vmatpush1.msra.mxu0 0.0
        %395 = vmatprep.subr.mxu0 0.0
        %396 = vmatpush1.msra.mxu0 0.0
        %397 = vmatprep.subr.mxu0 0.0
        %398 = vmatpush1.msra.mxu0 0.0
        %399 = vmatprep.subr.mxu0 0.0
        %400 = vmatpush1.msra.mxu0 0.0
        %401 = vmatprep.subr.mxu0 0.0
        %402 = vmatpush1.msra.mxu0 0.0
        %403 = vmatprep.subr.mxu0 0.0
        %404 = vmatpush1.msra.mxu0 0.0
        %405 = vmatprep.subr.mxu0 0.0
        %406 = vmatpush1.msra.mxu0 0.0
        %407 = vmatprep.subr.mxu0 0.0
        %408 = vmatpush1.msra.mxu0 0.0
        %409 = vmatprep.subr.mxu0 0.0
        %410 = vmatpush1.msra.mxu0 0.0
        %411 = vmatprep.subr.mxu0 0.0
        %412 = vmatpush1.msra.mxu0 0.0
        %413 = vmatprep.subr.mxu0 0.0
        %414 = vmatpush1.msra.mxu0 0.0
        %415 = vmatprep.subr.mxu0 0.0
        %416 = vmatpush1.msra.mxu0 0.0
        %417 = vmatprep.subr.mxu0 0.0
        %418 = vmatpush1.msra.mxu0 0.0
        %419 = vmatprep.subr.mxu0 0.0
        %420 = vmatpush1.msra.mxu0 0.0
        %421 = vmatprep.subr.mxu0 0.0
        %422 = vmatpush1.msra.mxu0 0.0
        %423 = vmatprep.subr.mxu0 0.0
        %424 = vmatpush1.msra.mxu0 0.0
        %425 = vmatprep.subr.mxu0 0.0
        %426 = vmatpush1.msra.mxu0 0.0
        %427 = vmatprep.subr.mxu0 0.0
        %428 = vmatpush1.msra.mxu0 0.0
        %429 = vmatprep.subr.mxu0 0.0
        %430 = vmatpush1.msra.mxu0 0.0
        %431 = vmatprep.subr.mxu0 0.0
        %432 = vmatpush1.msra.mxu0 0.0
        %433 = vmatprep.subr.mxu0 0.0
        %434 = vmatpush1.msra.mxu0 0.0
        %435 = vmatprep.subr.mxu0 0.0
        %436 = vmatpush1.msra.mxu0 0.0
        %437 = vmatprep.subr.mxu0 0.0
        %438 = vmatpush1.msra.mxu0 0.0
        %439 = vmatprep.mubr.f32.mxu0 0.0
        %440 = vmatmul.mubr.f32.gmra.mrb[0].mxu0 %v370
        %v441 = vpop.f32.mrb[0].mxu0
        %v442 = vadd.f32 %v361, %v441
        %v443 = vpop.f32.mrb[0].mxu0
        %444 = vmatprep.mubr.f32.mxu0 0.0
        %445 = vmatmul.mubr.f32.gmra.mrb[0].mxu0 %v373
        %v446 = vpop.f32.mrb[0].mxu0
        %v447 = vadd.f32 %v366, %v446
        %v448 = vpop.f32.mrb[0].mxu0
        %449 = vdwg.mxu0
        %v450 = vlaneseq
        %v451 = vand.u32 %v450, 127
        %s452 = smul.u32 %s24, 128
        %v453 = vstv %s452
        %v454 = vadd.s32 %v451, %v453
        %vm455 = vcmp.lt.s32.totalorder %v454, 200
        %v456 = vsel %vm455, 0.0, -1e+30
        %v457 = vadd.f32 %v442, %v456
        %v458 = vadd.f32 %v447, %v456
        %v459 = vld [vmem:[#allocation2] sm:$0xff]
        %v460 = vld [vmem:[#allocation2 + $0x8] sm:$0xff]
        %461 = vmax.xlane.f32.xlu0 %v457
        %v462 = vpop.xlane.xlu0 %461
        %463 = vmax.xlane.f32.xlu0 %v458
        %v464 = vpop.xlane.xlu0 %463
        %v465 = vmax.f32 %v459, %v462
        %v466 = vmax.f32 %v460, %v464
        %v467 = vsub.f32 %v459, %v465
        %v468 = vsub.f32 %v460, %v466
        %v469 = vmul.f32 %v467, 1.442695
        %v470 = vpow.pop %v469
        %v471 = vmul.f32 %v468, 1.442695
        %v472 = vpow.pop %v471
        %474 = vset.pattern.permute.xlu0 0
        %475 = vperm.xlu0 %474, %v465
        %v476 = vpop.permute.xlu0 %475
        %479 = vset.pattern.permute.xlu0 0
        %480 = vperm.xlu0 %479, %v466
        %v481 = vpop.permute.xlu0 %480
        %v483 = vsub.f32 %v457, %v476
        %v484 = vsub.f32 %v458, %v481
        %v485 = vmul.f32 %v483, 1.442695
        %v486 = vpow.pop %v485
        %v487 = vmul.f32 %v484, 1.442695
        %v488 = vpow.pop %v487
        %v489 = vmul.f32 %v486, %v270
        %v490 = vmul.f32 %v488, %v271
        %491 = vadd.xlane.f32.xlu0 %v486
        %v492 = vpop.xlane.xlu0 %491
        %493 = vadd.xlane.f32.xlu0 %v488
        %v494 = vpop.xlane.xlu0 %493
        %495 = vadd.xlane.f32.xlu0 %v489
        %v496 = vpop.xlane.xlu0 %495
        %497 = vadd.xlane.f32.xlu0 %v490
        %v498 = vpop.xlane.xlu0 %497
        %v499 = vmul.f32 %v489, %v270
        %v500 = vmul.f32 %v490, %v271
        %501 = vadd.xlane.f32.xlu0 %v499
        %v502 = vpop.xlane.xlu0 %501
        %503 = vadd.xlane.f32.xlu0 %v500
        %v504 = vpop.xlane.xlu0 %503
        %vm505 = vcmask 7168
        %v506 = vsel %vm505, %v492, %v496
        %v507 = vsel %vm505, %v494, %v498
        %vm508 = vcmask 15360
        %v509 = vsel %vm508, %v506, %v502
        %v510 = vsel %vm508, %v507, %v504
        %v511 = vld [vmem:[#allocation3] sm:$0xff]
        %v512 = vld [vmem:[#allocation3 + $0x8] sm:$0xff]
        %514 = vset.pattern.permute.xlu0 0
        %515 = vperm.xlu0 %514, %v470
        %v516 = vpop.permute.xlu0 %515
        %519 = vset.pattern.permute.xlu0 0
        %520 = vperm.xlu0 %519, %v472
        %v521 = vpop.permute.xlu0 %520
        %v523 = vmul.f32 %v516, %v511
        %v524 = vmul.f32 %v521, %v512
        %v525 = vadd.f32 %v523, %v509
        %v526 = vadd.f32 %v524, %v510
        %vm527 = vcmask 23552
        %528 = vst.msk [vmem:[#allocation3] sm:$0xff] %vm527, %v525
        %529 = vst.msk [vmem:[#allocation3 + $0x8] sm:$0xff] %vm527, %v526
        %530 = vst.msk [vmem:[#allocation2] sm:$0xff] %vm505, %v465
        %531 = vst.msk [vmem:[#allocation2 + $0x8] sm:$0xff] %vm505, %v466
        %p532 = scmp.eq.s32.totalorder %s24, 1
        // Predicated region
        $region49: #{tpu_custom_call.1} parent=39 // pred_check
          %p533 = pneg %p532
        $region50: #{tpu_custom_call.1} parent=39 // pred_check_branch
          %535 = sbr.rel (%p533) target = $region52
        $region51: #{tpu_custom_call.1} parent=39 // pred_region
          %v536 = vld [vmem:[#allocation3] sm:$0xff]
          %v537 = vld [vmem:[#allocation3 + $0x8] sm:$0xff]
          %v538 = vrcp.pop %v536
          %v539 = vrcp.pop %v537
          %542 = vrot.lane.b32.xlu0 %v538, 1
          %v543 = vpop.permute.xlu0 %542
          %544 = vrot.lane.b32.xlu0 %v539, 1
          %v545 = vpop.permute.xlu0 %544
          %v548 = vmul.f32 %v536, %v543
          %v549 = vmul.f32 %v537, %v545
          %550 = vrot.lane.b32.xlu0 %v538, 2
          %v551 = vpop.permute.xlu0 %550
          %552 = vrot.lane.b32.xlu0 %v539, 2
          %v553 = vpop.permute.xlu0 %552
          %v556 = vmul.f32 %v536, %v551
          %v557 = vmul.f32 %v537, %v553
          %v558 = vmul.f32 %v548, %v548
          %v559 = vmul.f32 %v549, %v549
          %562 = vrot.lane.b32.xlu0 %v558, 1
          %v563 = vpop.permute.xlu0 %562
          %564 = vrot.lane.b32.xlu0 %v559, 1
          %v565 = vpop.permute.xlu0 %564
          %v568 = vsub.f32 %v556, %v563
          %v569 = vsub.f32 %v557, %v565
          %v570 = vmax.f32 %v568, 1e-09
          %v571 = vmax.f32 %v569, 1e-09
          %v572 = vrsqrt.pop %v570
          %v573 = vmul.f32 %v570, %v572
          %vm574 = vcmp.eq.f32.partialorder %v570, inf
          %v575 = vsel %vm574, %v570, %v573
          %vm576 = vcmp.eq.f32.partialorder %v570, 0.0
          %v577 = vand.u32 %v570, 2147483648
          %v578 = vsel %vm576, %v577, %v575
          %v579 = vrsqrt.pop %v571
          %v580 = vmul.f32 %v571, %v579
          %vm581 = vcmp.eq.f32.partialorder %v571, inf
          %v582 = vsel %vm581, %v571, %v580
          %vm583 = vcmp.eq.f32.partialorder %v571, 0.0
          %v584 = vand.u32 %v571, 2147483648
          %v585 = vsel %vm583, %v584, %v582
          %588 = vrot.lane.b32.xlu0 %v548, 127
          %v589 = vpop.permute.xlu0 %588
          %590 = vrot.lane.b32.xlu0 %v549, 127
          %v591 = vpop.permute.xlu0 %590
          %596 = vrot.lane.b32.xlu0 %v578, 127
          %v597 = vpop.permute.xlu0 %596
          %598 = vrot.lane.b32.xlu0 %v585, 127
          %v599 = vpop.permute.xlu0 %598
          %v602 = vsel %vm505, %v589, %v597
          %v603 = vsel %vm505, %v591, %v599
          %604 = vst.msk [vmem:[%s259] sm:$0xff] %vm508, %v602
          %605 = vst.msk [vmem:[%s259 + $0x8] sm:$0xff] %vm508, %v603
        $region52: #{tpu_custom_call.1} parent=39 // pred_fallthru
          _
        %p606 = scmp.lt.s32.totalorder %s23, 1
        %s607 = scalar_select %p606, %s23, 1
        %s608 = smul.addr %s607, 2
        %s609 = smul.addr %s608, 8
        %s610 = scalar_lea.vmem %s5, %s609
        // Predicated region
        $region53: #{tpu_custom_call.1} parent=39 // pred_check
          %p611 = pneg %p161
        $region54: #{tpu_custom_call.1} parent=39 // pred_check_branch
          %613 = sbr.rel (%p611) target = $region56
        $region55: #{tpu_custom_call.1} parent=39 // pred_region
          _
        $region56: #{tpu_custom_call.1} parent=39 // pred_fallthru
          _
      $region40: #{tpu_custom_call.1} parent=5 // pred_fallthru
        _
      %p614 = scmp.le.s32.totalorder 2, %s14
      // Predicated region
      $region57: #{tpu_custom_call.1} parent=5 // pred_check
        %p615 = pneg %p614
      $region58: #{tpu_custom_call.1} parent=5 // pred_check_branch
        %617 = sbr.rel (%p615) target = $region60
      $region59: #{tpu_custom_call.1} parent=5 // pred_region
        %s618 = ssub.s32 %s14, 2
        // Predicated region
        $region61: #{tpu_custom_call.1} parent=59 // pred_check
          %p619 = pneg %p167
        $region62: #{tpu_custom_call.1} parent=59 // pred_check_branch
          %621 = sbr.rel (%p619) target = $region64
        $region63: #{tpu_custom_call.1} parent=59 // pred_region
          %p622 = scmp.lt.s32.totalorder %s25, 1
          %s623 = scalar_select %p622, %s25, 1
          %s624 = smul.addr %s623, 2
          %s625 = smul.addr %s624, 8
          %s626 = scalar_lea.vmem %s5, %s625
        $region64: #{tpu_custom_call.1} parent=59 // pred_fallthru
          _
      $region60: #{tpu_custom_call.1} parent=5 // pred_fallthru
        _
    $region6: #{tpu_custom_call.1} parent=1 // loop_footer
      %s18 = sadd.s32 1, %s14
    $region7: #{tpu_custom_call.1} parent=1 // loop_footer_branch
      %13 = sbr.rel target = $region3
    $region8: #{tpu_custom_call.1} parent=1 // loop_exit
      _
    %627 = vsyncpa [#allocation5], 1
    %s628 = scalar_lea.sflag [#allocation5], 1
    %629 = vsyncpa %s628, 1

</llo_original>
